<compile_context>
chip_gen: v5e
topology: v5e:2x2
jax: 0.10.0
libtpu: 0.0.40
codegen_flags: <defaults>
</compile_context>

<pallas_src>
import jax
import jax.numpy as jnp
from jax.experimental import pallas as pl
from jax.experimental.pallas import tpu as pltpu


def permute_scale_kernel(x_ref, s_ref, o_ref):
    # x_ref: (HW, Cb)  -- channels on the lane axis (lane-dense input tile)
    # s_ref: (1,  Cb)  -- per-channel scale, lane-aligned with x
    # o_ref: (Cb, HW)  -- HW on the lane axis (lane-dense output tile)
    y = x_ref[...] * s_ref[...]      # VPU multiply; scale broadcasts over sublanes
    o_ref[...] = y.T                 # 2D transpose -> XLU vxpose (free slot)


def permute_mul(x_nhwc, layer_scale):
    """x_nhwc: [N, H, W, C] float32; layer_scale: [C, 1, 1] float32.

    Returns layer_scale * permute(x, [0, 3, 1, 2])  -> [N, C, H, W].
    """
    n, h, w, c = x_nhwc.shape
    assert n == 1, "kernel written for batch 1 (matches the module)"
    c_blk = 128
    assert c % c_blk == 0, "C must be a multiple of 128"
    hw = h * w

    # Free metadata reshapes: NHWC (N=1) is contiguous as (H*W, C) and
    # NCHW (N=1) is contiguous as (C, H*W).
    x2d = x_nhwc.reshape(hw, c)
    scale_2d = layer_scale.reshape(1, c).astype(x_nhwc.dtype)

    out2d = pl.pallas_call(
        permute_scale_kernel,
        out_shape=jax.ShapeDtypeStruct((c, hw), x_nhwc.dtype),
        grid_spec=pl.GridSpec(
            grid=(c // c_blk,),
            in_specs=[
                pl.BlockSpec((hw, c_blk), lambda ci: (0, ci)),
                pl.BlockSpec((1, c_blk), lambda ci: (0, ci)),
            ],
            out_specs=pl.BlockSpec((c_blk, hw), lambda ci: (ci, 0)),
        ),
        compiler_params=pltpu.CompilerParams(
            dimension_semantics=("parallel",),
        ),
    )(x2d, scale_2d)

    return out2d.reshape(n, c, h, w)


if __name__ == "__main__":
    key = jax.random.PRNGKey(0)
    kx, ks = jax.random.split(key)

    # Shapes from the module: x74 is [1, 28, 28, 384], layer_scale5 is [384, 1, 1].
    x = jax.random.normal(kx, (1, 28, 28, 384), dtype=jnp.float32)
    layer_scale = jax.random.uniform(ks, (384, 1, 1), dtype=jnp.float32)

    out = permute_mul(x, layer_scale)
    out = jax.block_until_ready(out)

    # Pure-JAX reference of the fused permute + broadcast-mul.
    ref = jnp.transpose(x, (0, 3, 1, 2)) * layer_scale.reshape(1, 384, 1, 1)
    assert out.shape == (1, 384, 28, 28)
    assert jnp.allclose(out, ref, atol=1e-6, rtol=1e-6)

    print("KERNEL_OK")
</pallas_src>

<mosaic_0001>
module attributes {stable_mosaic.version = 11 : i64} {
  func.func @permute_scale_kernel(%arg0: i32, %arg1: memref<784x128xf32, #tpu.memory_space<vmem>>, %arg2: memref<1x128xf32, #tpu.memory_space<vmem>>, %arg3: memref<128x784xf32, #tpu.memory_space<vmem>>) attributes {dimension_semantics = [#tpu.dimension_semantics<parallel>], iteration_bounds = array<i64: 3>, scalar_prefetch = 0 : i64, scratch_operands = 0 : i64, tpu.core_type = #tpu.core_type<tc>, window_params = [{transform_indices = @transform_0, window_bounds = array<i64: 784, 128>}, {transform_indices = @transform_1, window_bounds = array<i64: 1, 128>}, {transform_indices = @transform_2, window_bounds = array<i64: 128, 784>}]} {
    %c0 = arith.constant 0 : index
    %c0_0 = arith.constant 0 : index
    %0 = vector.load %arg1[%c0, %c0_0] : memref<784x128xf32, #tpu.memory_space<vmem>>, vector<784x128xf32>
    %c0_1 = arith.constant 0 : index
    %c0_2 = arith.constant 0 : index
    %1 = vector.load %arg2[%c0_1, %c0_2] : memref<1x128xf32, #tpu.memory_space<vmem>>, vector<1x128xf32>
    %2 = vector.broadcast %1 : vector<1x128xf32> to vector<784x128xf32>
    %3 = arith.mulf %0, %2 : vector<784x128xf32>
    %4 = tpu.transpose %3, [1, 0] : vector<784x128xf32> -> vector<128x784xf32>
    %c0_3 = arith.constant 0 : index
    %c0_4 = arith.constant 0 : index
    %5 = vector.load %arg3[%c0_3, %c0_4] : memref<128x784xf32, #tpu.memory_space<vmem>>, vector<128x784xf32>
    tpu.vector_store %arg3[%c0_3, %c0_4], %4 {strides = array<i32>} : memref<128x784xf32, #tpu.memory_space<vmem>>, vector<128x784xf32>,
    return
  }
  func.func @transform_0(%arg0: i32) -> (i32, i32) {
    %c0_i32 = arith.constant 0 : i32
    %c0_i32_0 = arith.constant 0 : i32
    return %c0_i32, %arg0 : i32, i32
  }
  func.func @transform_1(%arg0: i32) -> (i32, i32) {
    %c0_i32 = arith.constant 0 : i32
    %c0_i32_0 = arith.constant 0 : i32
    return %c0_i32, %arg0 : i32, i32
  }
  func.func @transform_2(%arg0: i32) -> (i32, i32) {
    %c0_i32 = arith.constant 0 : i32
    %c0_i32_0 = arith.constant 0 : i32
    return %arg0, %c0_i32 : i32, i32
  }
}

</mosaic_0001>

<llo_original>
// kernel: tpu_custom_call.1
$region0: #{tpu_custom_call.1}
  #allocation0 [shape = 'u32[]', space=smem, size = 0x4, offset = 0x4, fixed_abs, tag = 'smem constant byte address 0x4 - core index']
  #allocation1 [shape = 'u32[72,128]{1,0:T(1,128)}', space=vmem, size = 0x9000, scoped, tag = 'internal scratch']
  %s0 = inlined_call_operand.hbm [shape: f32[784,384], index: 0, kind: input, shape index: {}]
  %s1 = inlined_call_operand.hbm [shape: f32[1,384], index: 1, kind: input, shape index: {}]
  %s2 = inlined_call_operand.vmem [shape: f32[384,784], index: 2, kind: output, shape index: {}]
  %s3 = sld [smem:[#allocation0]]
  $region49: #{tpu_custom_call.1} parent=0
    _
  %s5 = ssub.s32 1, %s3
  %s6 = scalar_select 0, %s5, %s3
  $region1: #{tpu_custom_call.1} parent=0
    #allocation2 [shape = 'u8[802816]{0}', space=vmem, size = 0xc4000, scoped, tag = 'input window, operand 0']
    #allocation3 [shape = 's32[2]{0}', space=sflag, size = 0x8, scoped, tag = 'scoped memory for tpu_custom_call.1']
    #allocation4 [shape = 'u8[1024]{0}', space=vmem, size = 0x400, scoped, tag = 'input window, operand 1']
    #allocation5 [shape = 's32[2]{0}', space=sflag, size = 0x8, scoped, tag = 'scoped memory for tpu_custom_call.1']
    %7 = vsyncpa [#allocation3], 0
    %s8 = scalar_lea.sflag [#allocation3], 1
    %9 = vsyncpa %s8, 0
    %10 = vsyncpa [#allocation5], 0
    %s11 = scalar_lea.sflag [#allocation5], 1
    %12 = vsyncpa %s11, 0
    loop: start=0, step=1, limit=5
    $region2: #{tpu_custom_call.1} parent=1 // loop_pre_header
      _
    $region3: #{tpu_custom_call.1} parent=1 // loop_header
      %s14 = sphi 0, %s18
      %p15 = scmp.ge.s32.totalorder %s14, 5
      %s24 = sphi 0, %s26
      %s27 = sphi 0, %s24
      %s28 = sphi 0, %s27
      %s44 = sphi 0, %s28
      %s50 = sphi 0, %s52
      %s53 = sphi 0, %s50
      %s54 = sphi 0, %s53
      %s70 = sphi 0, %s54
      %s76 = sphi 0, %s78
      %s79 = sphi 0, %s76
      %s80 = sphi 0, %s79
      %s96 = sphi 0, %s80
    $region4: #{tpu_custom_call.1} parent=1 // loop_header_branch
      %17 = sbr.rel (%p15) target = $region8
    $region5: #{tpu_custom_call.1} parent=1 // loop_body
      %s19 = ssub.s32 %s14, 1
      %s20 = ssub.s32 %s14, 2
      %s21 = sadd.s32 %s14, 1
      %s22 = ssub.s32 %s14, %s21
      %p23 = scmp.eq.s32.totalorder %s22, 0
      %s25 = sadd.s32 %s24, 1
      %s26 = scalar_select %p23, %s24, %s25
      %p29 = pneg %p23
      %p30 = scmp.eq.s32.totalorder %s14, 2
      %p31 = por %p29, %p30
      %p32 = scmp.ne.s32.totalorder %s24, %s27
      %p33 = scmp.eq.s32.totalorder %s14, 0
      %p34 = por %p32, %p33
      %p35 = scmp.ne.s32.totalorder %s24, %s27
      %p36 = scmp.eq.s32.totalorder %s19, 2
      %p37 = por %p35, %p36
      %p38 = scmp.ne.s32.totalorder %s27, %s28
      %p39 = scmp.eq.s32.totalorder %s19, 0
      %p40 = por %p38, %p39
      %p41 = scmp.ne.s32.totalorder %s27, %s28
      %p42 = scmp.eq.s32.totalorder %s20, 2
      %p43 = por %p41, %p42
      %p45 = scmp.ne.s32.totalorder %s28, %s44
      %p46 = scmp.eq.s32.totalorder %s20, 0
      %p47 = por %p45, %p46
      %s48 = ssub.s32 %s14, %s21
      %p49 = scmp.eq.s32.totalorder %s48, 0
      %s51 = sadd.s32 %s50, 1
      %s52 = scalar_select %p49, %s50, %s51
      %p55 = pneg %p49
      %p56 = scmp.eq.s32.totalorder %s14, 2
      %p57 = por %p55, %p56
      %p58 = scmp.ne.s32.totalorder %s50, %s53
      %p59 = scmp.eq.s32.totalorder %s14, 0
      %p60 = por %p58, %p59
      %p61 = scmp.ne.s32.totalorder %s50, %s53
      %p62 = scmp.eq.s32.totalorder %s19, 2
      %p63 = por %p61, %p62
      %p64 = scmp.ne.s32.totalorder %s53, %s54
      %p65 = scmp.eq.s32.totalorder %s19, 0
      %p66 = por %p64, %p65
      %p67 = scmp.ne.s32.totalorder %s53, %s54
      %p68 = scmp.eq.s32.totalorder %s20, 2
      %p69 = por %p67, %p68
      %p71 = scmp.ne.s32.totalorder %s54, %s70
      %p72 = scmp.eq.s32.totalorder %s20, 0
      %p73 = por %p71, %p72
      %s74 = ssub.s32 %s14, %s21
      %p75 = scmp.eq.s32.totalorder %s74, 0
      %s77 = sadd.s32 %s76, 1
      %s78 = scalar_select %p75, %s76, %s77
      %p81 = pneg %p75
      %p82 = scmp.eq.s32.totalorder %s14, 2
      %p83 = por %p81, %p82
      %p84 = scmp.ne.s32.totalorder %s76, %s79
      %p85 = scmp.eq.s32.totalorder %s14, 0
      %p86 = por %p84, %p85
      %p87 = scmp.ne.s32.totalorder %s76, %s79
      %p88 = scmp.eq.s32.totalorder %s19, 2
      %p89 = por %p87, %p88
      %p90 = scmp.ne.s32.totalorder %s79, %s80
      %p91 = scmp.eq.s32.totalorder %s19, 0
      %p92 = por %p90, %p91
      %p93 = scmp.ne.s32.totalorder %s79, %s80
      %p94 = scmp.eq.s32.totalorder %s20, 2
      %p95 = por %p93, %p94
      %p97 = scmp.ne.s32.totalorder %s80, %s96
      %p98 = scmp.eq.s32.totalorder %s20, 0
      %p99 = por %p97, %p98
      %p100 = scmp.le.s32.totalorder 1, %s14
      %p101 = scmp.lt.s32.totalorder %s14, 4
      %p102 = pnand %p100, %p101
      %p103 = pneg %p102
      // Predicated region
      $region9: #{tpu_custom_call.1} parent=5 // pred_check
        _
      $region10: #{tpu_custom_call.1} parent=5 // pred_check_branch
        %105 = sbr.rel (%p102) target = $region12
      $region11: #{tpu_custom_call.1} parent=5 // pred_region
        %s106 = ssub.s32 %s14, 1
      $region12: #{tpu_custom_call.1} parent=5 // pred_fallthru
        _
      %p107 = scmp.lt.s32.totalorder %s14, 3
      // Predicated region
      $region13: #{tpu_custom_call.1} parent=5 // pred_check
        %p108 = pneg %p107
      $region14: #{tpu_custom_call.1} parent=5 // pred_check_branch
        %110 = sbr.rel (%p108) target = $region16
      $region15: #{tpu_custom_call.1} parent=5 // pred_region
        // Predicated region
        $region17: #{tpu_custom_call.1} parent=15 // pred_check
          %p111 = pneg %p34
        $region18: #{tpu_custom_call.1} parent=15 // pred_check_branch
          %113 = sbr.rel (%p111) target = $region20
        $region19: #{tpu_custom_call.1} parent=15 // pred_region
          %s114 = sand.u32 %s24, 1
          %s115 = scalar_lea.sflag [#allocation3], %s114
          %s116 = sand.u32 %s24, 1
          %s117 = smul.addr %s116, 784
          %s118 = scalar_lea.vmem [#allocation2], %s117
          %120 = vsyncadd %s115, 0
          %s121 = smul.addr %s14, 8
          %s122 = scalar_lea.hbm %s0, %s121
          %s123 = sshll.u32 %s122, 4
          %s124 = int_to_ptr.hbm [resolvable:$true] %s123
          %s125 = sshll.u32 %s118, 4
          %s126 = int_to_ptr.vmem [resolvable:$true] %s125
          %131 = dma.hbm_to_vmem [thread:$0]  %s124, 12544, %s126, %s115, 384, 128, 8
        $region20: #{tpu_custom_call.1} parent=15 // pred_fallthru
          _
        // Predicated region
        $region21: #{tpu_custom_call.1} parent=15 // pred_check
          %p132 = pneg %p60
        $region22: #{tpu_custom_call.1} parent=15 // pred_check_branch
          %134 = sbr.rel (%p132) target = $region24
        $region23: #{tpu_custom_call.1} parent=15 // pred_region
          %s135 = sand.u32 %s50, 1
          %s136 = scalar_lea.sflag [#allocation5], %s135
          %s137 = sand.u32 %s50, 1
          %s138 = scalar_lea.vmem [#allocation4], %s137
          %140 = vsyncadd %s136, 0
          %s141 = scalar_lea.hbm %s1, %s14
          %s143 = sshll.u32 %s141, 4
          %s144 = int_to_ptr.hbm [resolvable:$true] %s143
          %s145 = sshll.u32 %s138, 4
          %s146 = int_to_ptr.vmem [resolvable:$true] %s145
          %148 = dma.hbm_to_vmem [thread:$0]  %s144, 16, %s146, %s136
        $region24: #{tpu_custom_call.1} parent=15 // pred_fallthru
          _
      $region16: #{tpu_custom_call.1} parent=5 // pred_fallthru
        _
      %p149 = scmp.le.s32.totalorder 1, %s14
      %p150 = scmp.lt.s32.totalorder %s14, 4
      %p151 = pnand %p149, %p150
      %p152 = pneg %p151
      // Predicated region
      $region25: #{tpu_custom_call.1} parent=5 // pred_check
        _
      $region26: #{tpu_custom_call.1} parent=5 // pred_check_branch
        %154 = sbr.rel (%p151) target = $region28
      $region27: #{tpu_custom_call.1} parent=5 // pred_region
        %s155 = ssub.s32 %s14, 1
        %s156 = sand.u32 %s27, 1
        %s157 = scalar_lea.sflag [#allocation3], %s156
        %s158 = sand.u32 %s27, 1
        %s159 = smul.addr %s158, 784
        %s160 = scalar_lea.vmem [#allocation2], %s159
        // Predicated region
        $region29: #{tpu_custom_call.1} parent=27 // pred_check
          %p161 = pneg %p40
        $region30: #{tpu_custom_call.1} parent=27 // pred_check_branch
          %163 = sbr.rel (%p161) target = $region32
        $region31: #{tpu_custom_call.1} parent=27 // pred_region
          %165 = dma.done %s157, 12544
        $region32: #{tpu_custom_call.1} parent=27 // pred_fallthru
          _
        %s166 = sand.u32 %s53, 1
        %s167 = scalar_lea.sflag [#allocation5], %s166
        %s168 = sand.u32 %s53, 1
        %s169 = scalar_lea.vmem [#allocation4], %s168
        // Predicated region
        $region33: #{tpu_custom_call.1} parent=27 // pred_check
          %p170 = pneg %p66
        $region34: #{tpu_custom_call.1} parent=27 // pred_check_branch
          %172 = sbr.rel (%p170) target = $region36
        $region35: #{tpu_custom_call.1} parent=27 // pred_region
          %174 = dma.done %s167, 16
        $region36: #{tpu_custom_call.1} parent=27 // pred_fallthru
          _
        %s175 = sand.u32 %s27, 1
        %s176 = scalar_lea.sflag [#allocation3], %s175
        %s177 = sand.u32 %s27, 1
        %s178 = smul.addr %s177, 784
        %s179 = scalar_lea.vmem [#allocation2], %s178
        %p180 = pneg %p40
        %p181 = pneg %p37
        %s182 = sand.u32 %s53, 1
        %s183 = scalar_lea.sflag [#allocation5], %s182
        %s184 = sand.u32 %s53, 1
        %s185 = scalar_lea.vmem [#allocation4], %s184
        %p186 = pneg %p66
        %p187 = pneg %p63
        %p188 = pneg %p92
        %p189 = pneg %p89
        %s190 = smul.u32 16, %s19
        %p191 = scmp.lt.s32.totalorder %s190, 47
        %s192 = scalar_select %p191, %s190, 47
        %s193 = smul.addr %s192, 7
        %s194 = smul.addr %s193, 8
        %s195 = scalar_lea.vmem %s2, %s194
        %s196 = smul.u32 16, %s19
        %p197 = scmp.lt.s32.totalorder %s196, 47
        %s198 = scalar_select %p197, %s196, 47
        %s199 = smul.addr %s198, 7
        %s200 = smul.addr %s199, 8
        %s201 = scalar_lea.vmem %s2, %s200
        %s202 = smul.u32 16, %s19
        %v203 = vld [vmem:[%s160] sm:$0xff]
        %v204 = vld [vmem:[%s160 + $0x8] sm:$0xff]
        %v205 = vld [vmem:[%s160 + $0x10] sm:$0xff]
        %v206 = vld [vmem:[%s160 + $0x18] sm:$0xff]
        %v207 = vld [vmem:[%s160 + $0x20] sm:$0xff]
        %v208 = vld [vmem:[%s160 + $0x28] sm:$0xff]
        %v209 = vld [vmem:[%s160 + $0x30] sm:$0xff]
        %v210 = vld [vmem:[%s160 + $0x38] sm:$0xff]
        %v211 = vld [vmem:[%s160 + $0x40] sm:$0xff]
        %v212 = vld [vmem:[%s160 + $0x48] sm:$0xff]
        %v213 = vld [vmem:[%s160 + $0x50] sm:$0xff]
        %v214 = vld [vmem:[%s160 + $0x58] sm:$0xff]
        %v215 = vld [vmem:[%s160 + $0x60] sm:$0xff]
        %v216 = vld [vmem:[%s160 + $0x68] sm:$0xff]
        %v217 = vld [vmem:[%s160 + $0x70] sm:$0xff]
        %v218 = vld [vmem:[%s160 + $0x78] sm:$0xff]
        %v219 = vld [vmem:[%s160 + $0x80] sm:$0xff]
        %v220 = vld [vmem:[%s160 + $0x88] sm:$0xff]
        %v221 = vld [vmem:[%s160 + $0x90] sm:$0xff]
        %v222 = vld [vmem:[%s160 + $0x98] sm:$0xff]
        %v223 = vld [vmem:[%s160 + $0xa0] sm:$0xff]
        %v224 = vld [vmem:[%s160 + $0xa8] sm:$0xff]
        %v225 = vld [vmem:[%s160 + $0xb0] sm:$0xff]
        %v226 = vld [vmem:[%s160 + $0xb8] sm:$0xff]
        %v227 = vld [vmem:[%s160 + $0xc0] sm:$0xff]
        %v228 = vld [vmem:[%s160 + $0xc8] sm:$0xff]
        %v229 = vld [vmem:[%s160 + $0xd0] sm:$0xff]
        %v230 = vld [vmem:[%s160 + $0xd8] sm:$0xff]
        %v231 = vld [vmem:[%s160 + $0xe0] sm:$0xff]
        %v232 = vld [vmem:[%s160 + $0xe8] sm:$0xff]
        %v233 = vld [vmem:[%s160 + $0xf0] sm:$0xff]
        %v234 = vld [vmem:[%s160 + $0xf8] sm:$0xff]
        %v235 = vld [vmem:[%s160 + $0x100] sm:$0xff]
        %v236 = vld [vmem:[%s160 + $0x108] sm:$0xff]
        %v237 = vld [vmem:[%s160 + $0x110] sm:$0xff]
        %v238 = vld [vmem:[%s160 + $0x118] sm:$0xff]
        %v239 = vld [vmem:[%s160 + $0x120] sm:$0xff]
        %v240 = vld [vmem:[%s160 + $0x128] sm:$0xff]
        %v241 = vld [vmem:[%s160 + $0x130] sm:$0xff]
        %v242 = vld [vmem:[%s160 + $0x138] sm:$0xff]
        %v243 = vld [vmem:[%s160 + $0x140] sm:$0xff]
        %v244 = vld [vmem:[%s160 + $0x148] sm:$0xff]
        %v245 = vld [vmem:[%s160 + $0x150] sm:$0xff]
        %v246 = vld [vmem:[%s160 + $0x158] sm:$0xff]
        %v247 = vld [vmem:[%s160 + $0x160] sm:$0xff]
        %v248 = vld [vmem:[%s160 + $0x168] sm:$0xff]
        %v249 = vld [vmem:[%s160 + $0x170] sm:$0xff]
        %v250 = vld [vmem:[%s160 + $0x178] sm:$0xff]
        %v251 = vld [vmem:[%s160 + $0x180] sm:$0xff]
        %v252 = vld [vmem:[%s160 + $0x188] sm:$0xff]
        %v253 = vld [vmem:[%s160 + $0x190] sm:$0xff]
        %v254 = vld [vmem:[%s160 + $0x198] sm:$0xff]
        %v255 = vld [vmem:[%s160 + $0x1a0] sm:$0xff]
        %v256 = vld [vmem:[%s160 + $0x1a8] sm:$0xff]
        %v257 = vld [vmem:[%s160 + $0x1b0] sm:$0xff]
        %v258 = vld [vmem:[%s160 + $0x1b8] sm:$0xff]
        %v259 = vld [vmem:[%s160 + $0x1c0] sm:$0xff]
        %v260 = vld [vmem:[%s160 + $0x1c8] sm:$0xff]
        %v261 = vld [vmem:[%s160 + $0x1d0] sm:$0xff]
        %v262 = vld [vmem:[%s160 + $0x1d8] sm:$0xff]
        %v263 = vld [vmem:[%s160 + $0x1e0] sm:$0xff]
        %v264 = vld [vmem:[%s160 + $0x1e8] sm:$0xff]
        %v265 = vld [vmem:[%s160 + $0x1f0] sm:$0xff]
        %v266 = vld [vmem:[%s160 + $0x1f8] sm:$0xff]
        %v267 = vld [vmem:[%s160 + $0x200] sm:$0xff]
        %v268 = vld [vmem:[%s160 + $0x208] sm:$0xff]
        %v269 = vld [vmem:[%s160 + $0x210] sm:$0xff]
        %v270 = vld [vmem:[%s160 + $0x218] sm:$0xff]
        %v271 = vld [vmem:[%s160 + $0x220] sm:$0xff]
        %v272 = vld [vmem:[%s160 + $0x228] sm:$0xff]
        %v273 = vld [vmem:[%s160 + $0x230] sm:$0xff]
        %v274 = vld [vmem:[%s160 + $0x238] sm:$0xff]
        %v275 = vld [vmem:[%s160 + $0x240] sm:$0xff]
        %v276 = vld [vmem:[%s160 + $0x248] sm:$0xff]
        %v277 = vld [vmem:[%s160 + $0x250] sm:$0xff]
        %v278 = vld [vmem:[%s160 + $0x258] sm:$0xff]
        %v279 = vld [vmem:[%s160 + $0x260] sm:$0xff]
        %v280 = vld [vmem:[%s160 + $0x268] sm:$0xff]
        %v281 = vld [vmem:[%s160 + $0x270] sm:$0xff]
        %v282 = vld [vmem:[%s160 + $0x278] sm:$0xff]
        %v283 = vld [vmem:[%s160 + $0x280] sm:$0xff]
        %v284 = vld [vmem:[%s160 + $0x288] sm:$0xff]
        %v285 = vld [vmem:[%s160 + $0x290] sm:$0xff]
        %v286 = vld [vmem:[%s160 + $0x298] sm:$0xff]
        %v287 = vld [vmem:[%s160 + $0x2a0] sm:$0xff]
        %v288 = vld [vmem:[%s160 + $0x2a8] sm:$0xff]
        %v289 = vld [vmem:[%s160 + $0x2b0] sm:$0xff]
        %v290 = vld [vmem:[%s160 + $0x2b8] sm:$0xff]
        %v291 = vld [vmem:[%s160 + $0x2c0] sm:$0xff]
        %v292 = vld [vmem:[%s160 + $0x2c8] sm:$0xff]
        %v293 = vld [vmem:[%s160 + $0x2d0] sm:$0xff]
        %v294 = vld [vmem:[%s160 + $0x2d8] sm:$0xff]
        %v295 = vld [vmem:[%s160 + $0x2e0] sm:$0xff]
        %v296 = vld [vmem:[%s160 + $0x2e8] sm:$0xff]
        %v297 = vld [vmem:[%s160 + $0x2f0] sm:$0xff]
        %v298 = vld [vmem:[%s160 + $0x2f8] sm:$0xff]
        %v299 = vld [vmem:[%s160 + $0x300] sm:$0xff]
        %v300 = vld [vmem:[%s160 + $0x308] sm:$0xff]
        %v301 = vld [vmem:[%s169] sm:$0x1]
        %v303 = vperm.slane %v301, 0
        %v305 = vmul.f32 %v203, %v303
        %v306 = vmul.f32 %v204, %v303
        %v307 = vmul.f32 %v205, %v303
        %v308 = vmul.f32 %v206, %v303
        %v309 = vmul.f32 %v207, %v303
        %v310 = vmul.f32 %v208, %v303
        %v311 = vmul.f32 %v209, %v303
        %v312 = vmul.f32 %v210, %v303
        %v313 = vmul.f32 %v211, %v303
        %v314 = vmul.f32 %v212, %v303
        %v315 = vmul.f32 %v213, %v303
        %v316 = vmul.f32 %v214, %v303
        %v317 = vmul.f32 %v215, %v303
        %v318 = vmul.f32 %v216, %v303
        %v319 = vmul.f32 %v217, %v303
        %v320 = vmul.f32 %v218, %v303
        %v321 = vmul.f32 %v219, %v303
        %v322 = vmul.f32 %v220, %v303
        %v323 = vmul.f32 %v221, %v303
        %v324 = vmul.f32 %v222, %v303
        %v325 = vmul.f32 %v223, %v303
        %v326 = vmul.f32 %v224, %v303
        %v327 = vmul.f32 %v225, %v303
        %v328 = vmul.f32 %v226, %v303
        %v329 = vmul.f32 %v227, %v303
        %v330 = vmul.f32 %v228, %v303
        %v331 = vmul.f32 %v229, %v303
        %v332 = vmul.f32 %v230, %v303
        %v333 = vmul.f32 %v231, %v303
        %v334 = vmul.f32 %v232, %v303
        %v335 = vmul.f32 %v233, %v303
        %v336 = vmul.f32 %v234, %v303
        %v337 = vmul.f32 %v235, %v303
        %v338 = vmul.f32 %v236, %v303
        %v339 = vmul.f32 %v237, %v303
        %v340 = vmul.f32 %v238, %v303
        %v341 = vmul.f32 %v239, %v303
        %v342 = vmul.f32 %v240, %v303
        %v343 = vmul.f32 %v241, %v303
        %v344 = vmul.f32 %v242, %v303
        %v345 = vmul.f32 %v243, %v303
        %v346 = vmul.f32 %v244, %v303
        %v347 = vmul.f32 %v245, %v303
        %v348 = vmul.f32 %v246, %v303
        %v349 = vmul.f32 %v247, %v303
        %v350 = vmul.f32 %v248, %v303
        %v351 = vmul.f32 %v249, %v303
        %v352 = vmul.f32 %v250, %v303
        %v353 = vmul.f32 %v251, %v303
        %v354 = vmul.f32 %v252, %v303
        %v355 = vmul.f32 %v253, %v303
        %v356 = vmul.f32 %v254, %v303
        %v357 = vmul.f32 %v255, %v303
        %v358 = vmul.f32 %v256, %v303
        %v359 = vmul.f32 %v257, %v303
        %v360 = vmul.f32 %v258, %v303
        %v361 = vmul.f32 %v259, %v303
        %v362 = vmul.f32 %v260, %v303
        %v363 = vmul.f32 %v261, %v303
        %v364 = vmul.f32 %v262, %v303
        %v365 = vmul.f32 %v263, %v303
        %v366 = vmul.f32 %v264, %v303
        %v367 = vmul.f32 %v265, %v303
        %v368 = vmul.f32 %v266, %v303
        %v369 = vmul.f32 %v267, %v303
        %v370 = vmul.f32 %v268, %v303
        %v371 = vmul.f32 %v269, %v303
        %v372 = vmul.f32 %v270, %v303
        %v373 = vmul.f32 %v271, %v303
        %v374 = vmul.f32 %v272, %v303
        %v375 = vmul.f32 %v273, %v303
        %v376 = vmul.f32 %v274, %v303
        %v377 = vmul.f32 %v275, %v303
        %v378 = vmul.f32 %v276, %v303
        %v379 = vmul.f32 %v277, %v303
        %v380 = vmul.f32 %v278, %v303
        %v381 = vmul.f32 %v279, %v303
        %v382 = vmul.f32 %v280, %v303
        %v383 = vmul.f32 %v281, %v303
        %v384 = vmul.f32 %v282, %v303
        %v385 = vmul.f32 %v283, %v303
        %v386 = vmul.f32 %v284, %v303
        %v387 = vmul.f32 %v285, %v303
        %v388 = vmul.f32 %v286, %v303
        %v389 = vmul.f32 %v287, %v303
        %v390 = vmul.f32 %v288, %v303
        %v391 = vmul.f32 %v289, %v303
        %v392 = vmul.f32 %v290, %v303
        %v393 = vmul.f32 %v291, %v303
        %v394 = vmul.f32 %v292, %v303
        %v395 = vmul.f32 %v293, %v303
        %v396 = vmul.f32 %v294, %v303
        %v397 = vmul.f32 %v295, %v303
        %v398 = vmul.f32 %v296, %v303
        %v399 = vmul.f32 %v297, %v303
        %v400 = vmul.f32 %v298, %v303
        %v401 = vmul.f32 %v299, %v303
        %v402 = vmul.f32 %v300, %v303
        %403 = vxpose.xlu0.b32.start [1/16] %v305, 128
        %404 = vxpose.xlu0.b32.cont [2/16] %v306, 128
        %405 = vxpose.xlu0.b32.cont [3/16] %v307, 128
        %406 = vxpose.xlu0.b32.cont [4/16] %v308, 128
        %407 = vxpose.xlu0.b32.cont [5/16] %v309, 128
        %408 = vxpose.xlu0.b32.cont [6/16] %v310, 128
        %409 = vxpose.xlu0.b32.cont [7/16] %v311, 128
        %410 = vxpose.xlu0.b32.cont [8/16] %v312, 128
        %411 = vxpose.xlu0.b32.cont [9/16] %v313, 128
        %412 = vxpose.xlu0.b32.cont [10/16] %v314, 128
        %413 = vxpose.xlu0.b32.cont [11/16] %v315, 128
        %414 = vxpose.xlu0.b32.cont [12/16] %v316, 128
        %415 = vxpose.xlu0.b32.cont [13/16] %v317, 128
        %416 = vxpose.xlu0.b32.cont [14/16] %v318, 128
        %417 = vxpose.xlu0.b32.cont [15/16] %v319, 128
        %418 = vxpose.xlu0.b32.end [16/16] %v320, 128
        %v419 = vpop.trf.xlu0
        %v420 = vpop.trf.xlu0
        %v421 = vpop.trf.xlu0
        %v422 = vpop.trf.xlu0
        %v423 = vpop.trf.xlu0
        %v424 = vpop.trf.xlu0
        %v425 = vpop.trf.xlu0
        %v426 = vpop.trf.xlu0
        %v427 = vpop.trf.xlu0
        %v428 = vpop.trf.xlu0
        %v429 = vpop.trf.xlu0
        %v430 = vpop.trf.xlu0
        %v431 = vpop.trf.xlu0
        %v432 = vpop.trf.xlu0
        %v433 = vpop.trf.xlu0
        %v434 = vpop.trf.xlu0
        %435 = vxpose.xlu0.b32.start [1/16] %v321, 128
        %436 = vxpose.xlu0.b32.cont [2/16] %v322, 128
        %437 = vxpose.xlu0.b32.cont [3/16] %v323, 128
        %438 = vxpose.xlu0.b32.cont [4/16] %v324, 128
        %439 = vxpose.xlu0.b32.cont [5/16] %v325, 128
        %440 = vxpose.xlu0.b32.cont [6/16] %v326, 128
        %441 = vxpose.xlu0.b32.cont [7/16] %v327, 128
        %442 = vxpose.xlu0.b32.cont [8/16] %v328, 128
        %443 = vxpose.xlu0.b32.cont [9/16] %v329, 128
        %444 = vxpose.xlu0.b32.cont [10/16] %v330, 128
        %445 = vxpose.xlu0.b32.cont [11/16] %v331, 128
        %446 = vxpose.xlu0.b32.cont [12/16] %v332, 128
        %447 = vxpose.xlu0.b32.cont [13/16] %v333, 128
        %448 = vxpose.xlu0.b32.cont [14/16] %v334, 128
        %449 = vxpose.xlu0.b32.cont [15/16] %v335, 128
        %450 = vxpose.xlu0.b32.end [16/16] %v336, 128
        %v451 = vpop.trf.xlu0
        %v452 = vpop.trf.xlu0
        %v453 = vpop.trf.xlu0
        %v454 = vpop.trf.xlu0
        %v455 = vpop.trf.xlu0
        %v456 = vpop.trf.xlu0
        %v457 = vpop.trf.xlu0
        %v458 = vpop.trf.xlu0
        %v459 = vpop.trf.xlu0
        %v460 = vpop.trf.xlu0
        %v461 = vpop.trf.xlu0
        %v462 = vpop.trf.xlu0
        %v463 = vpop.trf.xlu0
        %v464 = vpop.trf.xlu0
        %v465 = vpop.trf.xlu0
        %v466 = vpop.trf.xlu0
        %467 = vxpose.xlu0.b32.start [1/16] %v337, 128
        %468 = vxpose.xlu0.b32.cont [2/16] %v338, 128
        %469 = vxpose.xlu0.b32.cont [3/16] %v339, 128
        %470 = vxpose.xlu0.b32.cont [4/16] %v340, 128
        %471 = vxpose.xlu0.b32.cont [5/16] %v341, 128
        %472 = vxpose.xlu0.b32.cont [6/16] %v342, 128
        %473 = vxpose.xlu0.b32.cont [7/16] %v343, 128
        %474 = vxpose.xlu0.b32.cont [8/16] %v344, 128
        %475 = vxpose.xlu0.b32.cont [9/16] %v345, 128
        %476 = vxpose.xlu0.b32.cont [10/16] %v346, 128
        %477 = vxpose.xlu0.b32.cont [11/16] %v347, 128
        %478 = vxpose.xlu0.b32.cont [12/16] %v348, 128
        %479 = vxpose.xlu0.b32.cont [13/16] %v349, 128
        %480 = vxpose.xlu0.b32.cont [14/16] %v350, 128
        %481 = vxpose.xlu0.b32.cont [15/16] %v351, 128
        %482 = vxpose.xlu0.b32.end [16/16] %v352, 128
        %v483 = vpop.trf.xlu0
        %v484 = vpop.trf.xlu0
        %v485 = vpop.trf.xlu0
        %v486 = vpop.trf.xlu0
        %v487 = vpop.trf.xlu0
        %v488 = vpop.trf.xlu0
        %v489 = vpop.trf.xlu0
        %v490 = vpop.trf.xlu0
        %v491 = vpop.trf.xlu0
        %v492 = vpop.trf.xlu0
        %v493 = vpop.trf.xlu0
        %v494 = vpop.trf.xlu0
        %v495 = vpop.trf.xlu0
        %v496 = vpop.trf.xlu0
        %v497 = vpop.trf.xlu0
        %v498 = vpop.trf.xlu0
        %499 = vxpose.xlu0.b32.start [1/16] %v353, 128
        %500 = vxpose.xlu0.b32.cont [2/16] %v354, 128
        %501 = vxpose.xlu0.b32.cont [3/16] %v355, 128
        %502 = vxpose.xlu0.b32.cont [4/16] %v356, 128
        %503 = vxpose.xlu0.b32.cont [5/16] %v357, 128
        %504 = vxpose.xlu0.b32.cont [6/16] %v358, 128
        %505 = vxpose.xlu0.b32.cont [7/16] %v359, 128
        %506 = vxpose.xlu0.b32.cont [8/16] %v360, 128
        %507 = vxpose.xlu0.b32.cont [9/16] %v361, 128
        %508 = vxpose.xlu0.b32.cont [10/16] %v362, 128
        %509 = vxpose.xlu0.b32.cont [11/16] %v363, 128
        %510 = vxpose.xlu0.b32.cont [12/16] %v364, 128
        %511 = vxpose.xlu0.b32.cont [13/16] %v365, 128
        %512 = vxpose.xlu0.b32.cont [14/16] %v366, 128
        %513 = vxpose.xlu0.b32.cont [15/16] %v367, 128
        %514 = vxpose.xlu0.b32.end [16/16] %v368, 128
        %v515 = vpop.trf.xlu0
        %v516 = vpop.trf.xlu0
        %v517 = vpop.trf.xlu0
        %v518 = vpop.trf.xlu0
        %v519 = vpop.trf.xlu0
        %v520 = vpop.trf.xlu0
        %v521 = vpop.trf.xlu0
        %v522 = vpop.trf.xlu0
        %v523 = vpop.trf.xlu0
        %v524 = vpop.trf.xlu0
        %v525 = vpop.trf.xlu0
        %v526 = vpop.trf.xlu0
        %v527 = vpop.trf.xlu0
        %v528 = vpop.trf.xlu0
        %v529 = vpop.trf.xlu0
        %v530 = vpop.trf.xlu0
        %531 = vxpose.xlu0.b32.start [1/16] %v369, 128
        %532 = vxpose.xlu0.b32.cont [2/16] %v370, 128
        %533 = vxpose.xlu0.b32.cont [3/16] %v371, 128
        %534 = vxpose.xlu0.b32.cont [4/16] %v372, 128
        %535 = vxpose.xlu0.b32.cont [5/16] %v373, 128
        %536 = vxpose.xlu0.b32.cont [6/16] %v374, 128
        %537 = vxpose.xlu0.b32.cont [7/16] %v375, 128
        %538 = vxpose.xlu0.b32.cont [8/16] %v376, 128
        %539 = vxpose.xlu0.b32.cont [9/16] %v377, 128
        %540 = vxpose.xlu0.b32.cont [10/16] %v378, 128
        %541 = vxpose.xlu0.b32.cont [11/16] %v379, 128
        %542 = vxpose.xlu0.b32.cont [12/16] %v380, 128
        %543 = vxpose.xlu0.b32.cont [13/16] %v381, 128
        %544 = vxpose.xlu0.b32.cont [14/16] %v382, 128
        %545 = vxpose.xlu0.b32.cont [15/16] %v383, 128
        %546 = vxpose.xlu0.b32.end [16/16] %v384, 128
        %v547 = vpop.trf.xlu0
        %v548 = vpop.trf.xlu0
        %v549 = vpop.trf.xlu0
        %v550 = vpop.trf.xlu0
        %v551 = vpop.trf.xlu0
        %v552 = vpop.trf.xlu0
        %v553 = vpop.trf.xlu0
        %v554 = vpop.trf.xlu0
        %v555 = vpop.trf.xlu0
        %v556 = vpop.trf.xlu0
        %v557 = vpop.trf.xlu0
        %v558 = vpop.trf.xlu0
        %v559 = vpop.trf.xlu0
        %v560 = vpop.trf.xlu0
        %v561 = vpop.trf.xlu0
        %v562 = vpop.trf.xlu0
        %563 = vxpose.xlu0.b32.start [1/16] %v385, 128
        %564 = vxpose.xlu0.b32.cont [2/16] %v386, 128
        %565 = vxpose.xlu0.b32.cont [3/16] %v387, 128
        %566 = vxpose.xlu0.b32.cont [4/16] %v388, 128
        %567 = vxpose.xlu0.b32.cont [5/16] %v389, 128
        %568 = vxpose.xlu0.b32.cont [6/16] %v390, 128
        %569 = vxpose.xlu0.b32.cont [7/16] %v391, 128
        %570 = vxpose.xlu0.b32.cont [8/16] %v392, 128
        %571 = vxpose.xlu0.b32.cont [9/16] %v393, 128
        %572 = vxpose.xlu0.b32.cont [10/16] %v394, 128
        %573 = vxpose.xlu0.b32.cont [11/16] %v395, 128
        %574 = vxpose.xlu0.b32.cont [12/16] %v396, 128
        %575 = vxpose.xlu0.b32.cont [13/16] %v397, 128
        %576 = vxpose.xlu0.b32.cont [14/16] %v398, 128
        %577 = vxpose.xlu0.b32.cont [15/16] %v399, 128
        %578 = vxpose.xlu0.b32.end [16/16] %v400, 128
        %v579 = vpop.trf.xlu0
        %v580 = vpop.trf.xlu0
        %v581 = vpop.trf.xlu0
        %v582 = vpop.trf.xlu0
        %v583 = vpop.trf.xlu0
        %v584 = vpop.trf.xlu0
        %v585 = vpop.trf.xlu0
        %v586 = vpop.trf.xlu0
        %v587 = vpop.trf.xlu0
        %v588 = vpop.trf.xlu0
        %v589 = vpop.trf.xlu0
        %v590 = vpop.trf.xlu0
        %v591 = vpop.trf.xlu0
        %v592 = vpop.trf.xlu0
        %v593 = vpop.trf.xlu0
        %v594 = vpop.trf.xlu0
        %595 = vxpose.xlu0.b32.start [1/16] %v401, 128
        %596 = vxpose.xlu0.b32.cont [2/16] %v402, 128
        %597 = vxpose.xlu0.b32.cont [3/16] 0.0, 128
        %598 = vxpose.xlu0.b32.cont [4/16] 0.0, 128
        %599 = vxpose.xlu0.b32.cont [5/16] 0.0, 128
        %600 = vxpose.xlu0.b32.cont [6/16] 0.0, 128
        %601 = vxpose.xlu0.b32.cont [7/16] 0.0, 128
        %602 = vxpose.xlu0.b32.cont [8/16] 0.0, 128
        %603 = vxpose.xlu0.b32.cont [9/16] 0.0, 128
        %604 = vxpose.xlu0.b32.cont [10/16] 0.0, 128
        %605 = vxpose.xlu0.b32.cont [11/16] 0.0, 128
        %606 = vxpose.xlu0.b32.cont [12/16] 0.0, 128
        %607 = vxpose.xlu0.b32.cont [13/16] 0.0, 128
        %608 = vxpose.xlu0.b32.cont [14/16] 0.0, 128
        %609 = vxpose.xlu0.b32.cont [15/16] 0.0, 128
        %610 = vxpose.xlu0.b32.end [16/16] 0.0, 128
        %v611 = vpop.trf.xlu0
        %v612 = vpop.trf.xlu0
        %v613 = vpop.trf.xlu0
        %v614 = vpop.trf.xlu0
        %v615 = vpop.trf.xlu0
        %v616 = vpop.trf.xlu0
        %v617 = vpop.trf.xlu0
        %v618 = vpop.trf.xlu0
        %v619 = vpop.trf.xlu0
        %v620 = vpop.trf.xlu0
        %v621 = vpop.trf.xlu0
        %v622 = vpop.trf.xlu0
        %v623 = vpop.trf.xlu0
        %v624 = vpop.trf.xlu0
        %v625 = vpop.trf.xlu0
        %v626 = vpop.trf.xlu0
        %627 = vst [vmem:[%s201] sm:$0xff] %v419
        %628 = vst [vmem:[%s201 + $0x8] sm:$0xff] %v451
        %629 = vst [vmem:[%s201 + $0x10] sm:$0xff] %v483
        %630 = vst [vmem:[%s201 + $0x18] sm:$0xff] %v515
        %631 = vst [vmem:[%s201 + $0x20] sm:$0xff] %v547
        %632 = vst [vmem:[%s201 + $0x28] sm:$0xff] %v579
        %vm633 = vcmask 130048
        %634 = vst.msk [vmem:[%s201 + $0x30] sm:$0xff] %vm633, %v611
        %635 = vst [vmem:[%s201 + $0x38] sm:$0xff] %v420
        %636 = vst [vmem:[%s201 + $0x40] sm:$0xff] %v452
        %637 = vst [vmem:[%s201 + $0x48] sm:$0xff] %v484
        %638 = vst [vmem:[%s201 + $0x50] sm:$0xff] %v516
        %639 = vst [vmem:[%s201 + $0x58] sm:$0xff] %v548
        %640 = vst [vmem:[%s201 + $0x60] sm:$0xff] %v580
        %641 = vst.msk [vmem:[%s201 + $0x68] sm:$0xff] %vm633, %v612
        %642 = vst [vmem:[%s201 + $0x70] sm:$0xff] %v421
        %643 = vst [vmem:[%s201 + $0x78] sm:$0xff] %v453
        %644 = vst [vmem:[%s201 + $0x80] sm:$0xff] %v485
        %645 = vst [vmem:[%s201 + $0x88] sm:$0xff] %v517
        %646 = vst [vmem:[%s201 + $0x90] sm:$0xff] %v549
        %647 = vst [vmem:[%s201 + $0x98] sm:$0xff] %v581
        %648 = vst.msk [vmem:[%s201 + $0xa0] sm:$0xff] %vm633, %v613
        %649 = vst [vmem:[%s201 + $0xa8] sm:$0xff] %v422
        %650 = vst [vmem:[%s201 + $0xb0] sm:$0xff] %v454
        %651 = vst [vmem:[%s201 + $0xb8] sm:$0xff] %v486
        %652 = vst [vmem:[%s201 + $0xc0] sm:$0xff] %v518
        %653 = vst [vmem:[%s201 + $0xc8] sm:$0xff] %v550
        %654 = vst [vmem:[%s201 + $0xd0] sm:$0xff] %v582
        %655 = vst.msk [vmem:[%s201 + $0xd8] sm:$0xff] %vm633, %v614
        %656 = vst [vmem:[%s201 + $0xe0] sm:$0xff] %v423
        %657 = vst [vmem:[%s201 + $0xe8] sm:$0xff] %v455
        %658 = vst [vmem:[%s201 + $0xf0] sm:$0xff] %v487
        %659 = vst [vmem:[%s201 + $0xf8] sm:$0xff] %v519
        %660 = vst [vmem:[%s201 + $0x100] sm:$0xff] %v551
        %661 = vst [vmem:[%s201 + $0x108] sm:$0xff] %v583
        %662 = vst.msk [vmem:[%s201 + $0x110] sm:$0xff] %vm633, %v615
        %663 = vst [vmem:[%s201 + $0x118] sm:$0xff] %v424
        %664 = vst [vmem:[%s201 + $0x120] sm:$0xff] %v456
        %665 = vst [vmem:[%s201 + $0x128] sm:$0xff] %v488
        %666 = vst [vmem:[%s201 + $0x130] sm:$0xff] %v520
        %667 = vst [vmem:[%s201 + $0x138] sm:$0xff] %v552
        %668 = vst [vmem:[%s201 + $0x140] sm:$0xff] %v584
        %669 = vst.msk [vmem:[%s201 + $0x148] sm:$0xff] %vm633, %v616
        %670 = vst [vmem:[%s201 + $0x150] sm:$0xff] %v425
        %671 = vst [vmem:[%s201 + $0x158] sm:$0xff] %v457
        %672 = vst [vmem:[%s201 + $0x160] sm:$0xff] %v489
        %673 = vst [vmem:[%s201 + $0x168] sm:$0xff] %v521
        %674 = vst [vmem:[%s201 + $0x170] sm:$0xff] %v553
        %675 = vst [vmem:[%s201 + $0x178] sm:$0xff] %v585
        %676 = vst.msk [vmem:[%s201 + $0x180] sm:$0xff] %vm633, %v617
        %677 = vst [vmem:[%s201 + $0x188] sm:$0xff] %v426
        %678 = vst [vmem:[%s201 + $0x190] sm:$0xff] %v458
        %679 = vst [vmem:[%s201 + $0x198] sm:$0xff] %v490
        %680 = vst [vmem:[%s201 + $0x1a0] sm:$0xff] %v522
        %681 = vst [vmem:[%s201 + $0x1a8] sm:$0xff] %v554
        %682 = vst [vmem:[%s201 + $0x1b0] sm:$0xff] %v586
        %683 = vst.msk [vmem:[%s201 + $0x1b8] sm:$0xff] %vm633, %v618
        %684 = vst [vmem:[%s201 + $0x1c0] sm:$0xff] %v427
        %685 = vst [vmem:[%s201 + $0x1c8] sm:$0xff] %v459
        %686 = vst [vmem:[%s201 + $0x1d0] sm:$0xff] %v491
        %687 = vst [vmem:[%s201 + $0x1d8] sm:$0xff] %v523
        %688 = vst [vmem:[%s201 + $0x1e0] sm:$0xff] %v555
        %689 = vst [vmem:[%s201 + $0x1e8] sm:$0xff] %v587
        %690 = vst.msk [vmem:[%s201 + $0x1f0] sm:$0xff] %vm633, %v619
        %691 = vst [vmem:[%s201 + $0x1f8] sm:$0xff] %v428
        %692 = vst [vmem:[%s201 + $0x200] sm:$0xff] %v460
        %693 = vst [vmem:[%s201 + $0x208] sm:$0xff] %v492
        %694 = vst [vmem:[%s201 + $0x210] sm:$0xff] %v524
        %695 = vst [vmem:[%s201 + $0x218] sm:$0xff] %v556
        %696 = vst [vmem:[%s201 + $0x220] sm:$0xff] %v588
        %697 = vst.msk [vmem:[%s201 + $0x228] sm:$0xff] %vm633, %v620
        %698 = vst [vmem:[%s201 + $0x230] sm:$0xff] %v429
        %699 = vst [vmem:[%s201 + $0x238] sm:$0xff] %v461
        %700 = vst [vmem:[%s201 + $0x240] sm:$0xff] %v493
        %701 = vst [vmem:[%s201 + $0x248] sm:$0xff] %v525
        %702 = vst [vmem:[%s201 + $0x250] sm:$0xff] %v557
        %703 = vst [vmem:[%s201 + $0x258] sm:$0xff] %v589
        %704 = vst.msk [vmem:[%s201 + $0x260] sm:$0xff] %vm633, %v621
        %705 = vst [vmem:[%s201 + $0x268] sm:$0xff] %v430
        %706 = vst [vmem:[%s201 + $0x270] sm:$0xff] %v462
        %707 = vst [vmem:[%s201 + $0x278] sm:$0xff] %v494
        %708 = vst [vmem:[%s201 + $0x280] sm:$0xff] %v526
        %709 = vst [vmem:[%s201 + $0x288] sm:$0xff] %v558
        %710 = vst [vmem:[%s201 + $0x290] sm:$0xff] %v590
        %711 = vst.msk [vmem:[%s201 + $0x298] sm:$0xff] %vm633, %v622
        %712 = vst [vmem:[%s201 + $0x2a0] sm:$0xff] %v431
        %713 = vst [vmem:[%s201 + $0x2a8] sm:$0xff] %v463
        %714 = vst [vmem:[%s201 + $0x2b0] sm:$0xff] %v495
        %715 = vst [vmem:[%s201 + $0x2b8] sm:$0xff] %v527
        %716 = vst [vmem:[%s201 + $0x2c0] sm:$0xff] %v559
        %717 = vst [vmem:[%s201 + $0x2c8] sm:$0xff] %v591
        %718 = vst.msk [vmem:[%s201 + $0x2d0] sm:$0xff] %vm633, %v623
        %719 = vst [vmem:[%s201 + $0x2d8] sm:$0xff] %v432
        %720 = vst [vmem:[%s201 + $0x2e0] sm:$0xff] %v464
        %721 = vst [vmem:[%s201 + $0x2e8] sm:$0xff] %v496
        %722 = vst [vmem:[%s201 + $0x2f0] sm:$0xff] %v528
        %723 = vst [vmem:[%s201 + $0x2f8] sm:$0xff] %v560
        %724 = vst [vmem:[%s201 + $0x300] sm:$0xff] %v592
        %725 = vst.msk [vmem:[%s201 + $0x308] sm:$0xff] %vm633, %v624
        %726 = vst [vmem:[%s201 + $0x310] sm:$0xff] %v433
        %727 = vst [vmem:[%s201 + $0x318] sm:$0xff] %v465
        %728 = vst [vmem:[%s201 + $0x320] sm:$0xff] %v497
        %729 = vst [vmem:[%s201 + $0x328] sm:$0xff] %v529
        %730 = vst [vmem:[%s201 + $0x330] sm:$0xff] %v561
        %731 = vst [vmem:[%s201 + $0x338] sm:$0xff] %v593
        %732 = vst.msk [vmem:[%s201 + $0x340] sm:$0xff] %vm633, %v625
        %733 = vst [vmem:[%s201 + $0x348] sm:$0xff] %v434
        %734 = vst [vmem:[%s201 + $0x350] sm:$0xff] %v466
        %735 = vst [vmem:[%s201 + $0x358] sm:$0xff] %v498
        %736 = vst [vmem:[%s201 + $0x360] sm:$0xff] %v530
        %737 = vst [vmem:[%s201 + $0x368] sm:$0xff] %v562
        %738 = vst [vmem:[%s201 + $0x370] sm:$0xff] %v594
        %739 = vst.msk [vmem:[%s201 + $0x378] sm:$0xff] %vm633, %v626
        %s740 = smul.u32 16, %s19
        %p741 = scmp.lt.s32.totalorder %s740, 47
        %s742 = scalar_select %p741, %s740, 47
        %s743 = smul.addr %s742, 7
        %s744 = smul.addr %s743, 8
        %s745 = scalar_lea.vmem %s2, %s744
        // Predicated region
        $region37: #{tpu_custom_call.1} parent=27 // pred_check
          %p746 = pneg %p89
        $region38: #{tpu_custom_call.1} parent=27 // pred_check_branch
          %748 = sbr.rel (%p746) target = $region40
        $region39: #{tpu_custom_call.1} parent=27 // pred_region
          %s749 = smul.u32 16, %s19
        $region40: #{tpu_custom_call.1} parent=27 // pred_fallthru
          _
      $region28: #{tpu_custom_call.1} parent=5 // pred_fallthru
        _
      %p750 = scmp.le.s32.totalorder 2, %s14
      // Predicated region
      $region41: #{tpu_custom_call.1} parent=5 // pred_check
        %p751 = pneg %p750
      $region42: #{tpu_custom_call.1} parent=5 // pred_check_branch
        %753 = sbr.rel (%p751) target = $region44
      $region43: #{tpu_custom_call.1} parent=5 // pred_region
        %s754 = ssub.s32 %s14, 2
        // Predicated region
        $region45: #{tpu_custom_call.1} parent=43 // pred_check
          %p755 = pneg %p95
        $region46: #{tpu_custom_call.1} parent=43 // pred_check_branch
          %757 = sbr.rel (%p755) target = $region48
        $region47: #{tpu_custom_call.1} parent=43 // pred_region
          %s758 = smul.u32 16, %s20
          %p759 = scmp.lt.s32.totalorder %s758, 47
          %s760 = scalar_select %p759, %s758, 47
          %s761 = smul.addr %s760, 7
          %s762 = smul.addr %s761, 8
          %s763 = scalar_lea.vmem %s2, %s762
        $region48: #{tpu_custom_call.1} parent=43 // pred_fallthru
          _
      $region44: #{tpu_custom_call.1} parent=5 // pred_fallthru
        _
    $region6: #{tpu_custom_call.1} parent=1 // loop_footer
      %s18 = sadd.s32 1, %s14
    $region7: #{tpu_custom_call.1} parent=1 // loop_footer_branch
      %13 = sbr.rel target = $region3
    $region8: #{tpu_custom_call.1} parent=1 // loop_exit
      _
    %764 = vsyncpa [#allocation3], 1
    %s765 = scalar_lea.sflag [#allocation3], 1
    %766 = vsyncpa %s765, 1
    %767 = vsyncpa [#allocation5], 1
    %s768 = scalar_lea.sflag [#allocation5], 1
    %769 = vsyncpa %s768, 1

</llo_original>
